<compile_context>
chip_gen: v6e
topology: v6e:2x2x1
jax: 0.10.0
libtpu: 0.0.40
codegen_flags: <defaults>
</compile_context>

<pallas_src>
import functools
import math

import jax
import jax.numpy as jnp
from jax import lax
from jax.experimental import pallas as pl
from jax.experimental.pallas import tpu as pltpu

_INV_SQRT2 = 0.7071067811865476
_MIB = 1024 * 1024
# Conservative cross-generation VMEM budget (v7x: 64 MiB physical per TC).
_DEFAULT_VMEM_BUDGET = 44 * _MIB


def _gelu_exact(g):
    # torch.nn.functional.gelu default (erf form), computed in f32.
    return 0.5 * g * (1.0 + lax.erf(g * _INV_SQRT2))


def _round_up(x, m):
    return (x + m - 1) // m * m


def _cdiv(a, b):
    return (a + b - 1) // b


def _pad_to(a, axis, target):
    pad = target - a.shape[axis]
    if pad == 0:
        return a
    widths = [(0, 0)] * a.ndim
    widths[axis] = (0, pad)
    return jnp.pad(a, widths)


# ----------------------------------------------------------------------------
# Kernels
# ----------------------------------------------------------------------------
def _ff_geglu_resident_kernel(inner_p, x_ref, w1_ref, b1_ref, w2_ref, b2_ref, o_ref):
    """Weights-resident single pass. Grid = (M tiles,).

    w1_ref holds [value | gate] halves so one MXU matmul computes both GEGLU
    projections; all weights have constant index maps (DMA'd once).
    """
    x = x_ref[...]                                                   # (tm, dim_p) bf16
    h = jnp.dot(x, w1_ref[...], preferred_element_type=jnp.float32) + b1_ref[...]
    val = h[:, :inner_p]
    gate = h[:, inner_p:]
    act = val * _gelu_exact(gate)                                    # f32
    # dropout(p=0.0) is identity
    y = jnp.dot(act.astype(jnp.bfloat16), w2_ref[...],
                preferred_element_type=jnp.float32) + b2_ref[...]
    o_ref[...] = y.astype(o_ref.dtype)


def _ff_geglu_tiled_kernel(tn, inner_p, x_ref, w1v_ref, w1g_ref, b1_ref, w2_ref,
                           b2_ref, o_ref, acc_ref):
    """Tiled fallback. Grid = (i = token tile, n = inner_dim tile); n reduces."""
    n = pl.program_id(1)

    @pl.when(n == 0)
    def _():
        acc_ref[...] = jnp.zeros_like(acc_ref)

    x = x_ref[...]                                                   # (tm, dim_p) bf16

    # Resident full bias: slice the current inner tile (value / gate halves).
    off_v = pl.multiple_of(n * tn, 128)
    off_g = pl.multiple_of(inner_p + n * tn, 128)
    b1v = b1_ref[:, pl.ds(off_v, tn)]
    b1g = b1_ref[:, pl.ds(off_g, tn)]

    val = jnp.dot(x, w1v_ref[...], preferred_element_type=jnp.float32) + b1v
    gate = jnp.dot(x, w1g_ref[...], preferred_element_type=jnp.float32) + b1g
    act = val * _gelu_exact(gate)

    # dropout(p=0.0) is identity; accumulate partial output projection.
    acc_ref[...] += jnp.dot(act.astype(jnp.bfloat16), w2_ref[...],
                            preferred_element_type=jnp.float32)

    @pl.when(n == pl.num_programs(1) - 1)
    def _():
        o_ref[...] = (acc_ref[...] + b2_ref[...]).astype(o_ref.dtype)


# ----------------------------------------------------------------------------
# Host-side helpers
# ----------------------------------------------------------------------------
def prepare_feedforward_params(w1, b1, w2, b2):
    """Pad + cast the FeedForward parameters once (hoisted out of the hot path).

    Weights are stored pre-transposed (in, out) relative to torch's (out, in):
      w1: (dim, 2*inner)    b1: (2*inner,)
      w2: (inner, dim_out)  b2: (dim_out,)
    """
    dim, two_inner = w1.shape
    inner = two_inner // 2
    dim_out = w2.shape[1]

    dim_p = _round_up(dim, 128)
    inner_p = _round_up(inner, 128)
    dout_p = _round_up(dim_out, 128)

    # W1 laid out as [value half | gate half], each half padded to inner_p.
    w1v = _pad_to(_pad_to(w1[:, :inner], 0, dim_p), 1, inner_p)
    w1g = _pad_to(_pad_to(w1[:, inner:], 0, dim_p), 1, inner_p)
    w1_p = jnp.concatenate([w1v, w1g], axis=1).astype(jnp.bfloat16)   # (dim_p, 2*inner_p)

    b1v = _pad_to(b1[:inner].reshape(1, inner), 1, inner_p)
    b1g = _pad_to(b1[inner:].reshape(1, inner), 1, inner_p)
    b1_p = jnp.concatenate([b1v, b1g], axis=1).astype(jnp.float32)    # (1, 2*inner_p)

    w2_p = _pad_to(_pad_to(w2, 0, inner_p), 1, dout_p).astype(jnp.bfloat16)
    b2_p = _pad_to(b2.reshape(1, dim_out), 1, dout_p).astype(jnp.float32)

    return dict(w1=w1_p, b1=b1_p, w2=w2_p, b2=b2_p,
                dim=dim, inner=inner, dim_out=dim_out,
                dim_p=dim_p, inner_p=inner_p, dout_p=dout_p)


def feedforward_geglu(x, params, *, tm=512, tn=1024,
                      vmem_budget_bytes=_DEFAULT_VMEM_BUDGET, force_tiled=False):
    """Apply the GEGLU FeedForward: x (B, S, dim) -> (B, S, dim_out)."""
    dim, inner, dim_out = params["dim"], params["inner"], params["dim_out"]
    dim_p, inner_p, dout_p = params["dim_p"], params["inner_p"], params["dout_p"]
    w1_p, b1_p, w2_p, b2_p = params["w1"], params["b1"], params["w2"], params["b2"]

    B, S, _ = x.shape
    M = B * S
    out_dtype = x.dtype
    out_itemsize = jnp.dtype(out_dtype).itemsize

    def nbytes(a):
        return a.size * jnp.dtype(a.dtype).itemsize

    w1_bytes, b1_bytes = nbytes(w1_p), nbytes(b1_p)
    w2_bytes, b2_bytes = nbytes(w2_p), nbytes(b2_p)

    # ---- token tile ---------------------------------------------------------
    m_aligned = _round_up(M, 16)                    # bf16 sublane packing
    tm = max(16, min(_round_up(tm, 16), m_aligned))

    # ---- path selection (VMEM-budgeted) ---------------------------------------
    def resident_need(tm_):
        # 2x per input: Pallas allocates buffer_count=2 even for constant blocks.
        interm = (tm_ * 2 * inner_p * 4             # h (f32)
                  + tm_ * inner_p * (4 + 2)         # act f32 + bf16 copy for MXU
                  + tm_ * dout_p * 4)               # y (f32) before output cast
        return (2 * (w1_bytes + b1_bytes + w2_bytes + b2_bytes)
                + 2 * tm_ * dim_p * 2
                + 2 * tm_ * dout_p * out_itemsize
                + interm)

    use_resident = (not force_tiled) and resident_need(tm) <= vmem_budget_bytes

    if not use_resident:
        # tn must be a multiple of 128 that divides inner_p.
        tn = min(tn, inner_p)
        tn = max(128, (tn // 128) * 128)
        while inner_p % tn:
            tn -= 128

        def tiled_need(tm_, tn_):
            return (2 * tm_ * dim_p * 2             # x (bf16, double-buffered)
                    + 2 * tm_ * dout_p * out_itemsize
                    + 2 * 2 * dim_p * tn_ * 2       # W1 value + gate tiles
                    + 2 * tn_ * dout_p * 2          # W2 tile
                    + 2 * (b1_bytes + b2_bytes)     # resident biases
                    + tm_ * dout_p * 4              # f32 accumulator scratch
                    + tm_ * tn_ * (4 + 4 + 4 + 2))  # val/gate/act intermediates

        while tiled_need(tm, tn) > vmem_budget_bytes and tn > 128:
            tn = max(128, (tn // 2 // 128) * 128)
            while inner_p % tn:
                tn -= 128
        while tiled_need(tm, tn) > vmem_budget_bytes and tm > 16:
            tm = max(16, _round_up(tm // 2, 16))

    # ---- M tiling: ensure >= 2 "parallel" tiles when M is big (v7x megacore) --
    n_m_tiles = _cdiv(m_aligned, tm)
    if n_m_tiles == 1 and m_aligned >= 512:
        n_m_tiles = 2
    tm = _round_up(_cdiv(m_aligned, n_m_tiles), 16)
    m_p = tm * n_m_tiles

    # ---- pad / cast activations (per call; weights already prepared once) -----
    x2d = _pad_to(_pad_to(x.reshape(M, dim), 1, dim_p), 0, m_p).astype(jnp.bfloat16)

    flops = 2 * M * dim * (2 * inner) + 2 * M * inner * dim_out
    x_bytes = m_p * dim_p * 2
    o_bytes = m_p * dout_p * out_itemsize

    if use_resident:
        need = resident_need(tm)
        bytes_accessed = x_bytes + o_bytes + w1_bytes + b1_bytes + w2_bytes + b2_bytes
        grid = (n_m_tiles,)
        in_specs = [
            pl.BlockSpec((tm, dim_p), lambda i: (i, 0)),              # x tile
            pl.BlockSpec((dim_p, 2 * inner_p), lambda i: (0, 0)),     # W1 [val|gate], resident
            pl.BlockSpec((1, 2 * inner_p), lambda i: (0, 0)),         # b1, resident
            pl.BlockSpec((inner_p, dout_p), lambda i: (0, 0)),        # W2, resident
            pl.BlockSpec((1, dout_p), lambda i: (0, 0)),              # b2, resident
        ]
        out_specs = pl.BlockSpec((tm, dout_p), lambda i: (i, 0))
        scratch_shapes = []
        kernel = functools.partial(_ff_geglu_resident_kernel, inner_p)
        dim_sem = ("parallel",)
        args = (x2d, w1_p, b1_p, w2_p, b2_p)
    else:
        need = tiled_need(tm, tn)
        n_inner_tiles = inner_p // tn
        # W1/W2 are re-streamed once per M tile; biases fetched once (resident).
        bytes_accessed = (x_bytes + o_bytes
                          + n_m_tiles * (w1_bytes + w2_bytes)
                          + b1_bytes + b2_bytes)
        grid = (n_m_tiles, n_inner_tiles)
        in_specs = [
            pl.BlockSpec((tm, dim_p), lambda i, n: (i, 0)),                  # x tile
            pl.BlockSpec((dim_p, tn), lambda i, n: (0, n)),                  # W1 value tile
            pl.BlockSpec((dim_p, tn), lambda i, n: (0, n + n_inner_tiles)),  # W1 gate tile
            pl.BlockSpec((1, 2 * inner_p), lambda i, n: (0, 0)),             # b1, resident
            pl.BlockSpec((tn, dout_p), lambda i, n: (n, 0)),                 # W2 tile
            pl.BlockSpec((1, dout_p), lambda i, n: (0, 0)),                  # b2, resident
        ]
        out_specs = pl.BlockSpec((tm, dout_p), lambda i, n: (i, 0))
        scratch_shapes = [pltpu.VMEM((tm, dout_p), jnp.float32)]
        kernel = functools.partial(_ff_geglu_tiled_kernel, tn, inner_p)
        dim_sem = ("parallel", "arbitrary")
        # w1_p passed twice: value-half view and gate-half view via index maps.
        args = (x2d, w1_p, w1_p, b1_p, w2_p, b2_p)

    vmem_limit = max(32 * _MIB, int(need * 1.25) + 2 * _MIB)

    out2d = pl.pallas_call(
        kernel,
        out_shape=jax.ShapeDtypeStruct((m_p, dout_p), out_dtype),
        grid_spec=pltpu.PrefetchScalarGridSpec(
            num_scalar_prefetch=0,
            grid=grid,
            in_specs=in_specs,
            out_specs=out_specs,
            scratch_shapes=scratch_shapes,
        ),
        compiler_params=pltpu.CompilerParams(
            dimension_semantics=dim_sem,
            vmem_limit_bytes=vmem_limit,
        ),
        cost_estimate=pl.CostEstimate(
            flops=flops,
            transcendentals=M * inner,
            bytes_accessed=int(bytes_accessed),
        ),
    )(*args)

    return out2d[:M, :dim_out].reshape(B, S, dim_out)


# ----------------------------------------------------------------------------
# Reference + demo
# ----------------------------------------------------------------------------
def _reference(x, w1, b1, w2, b2):
    inner = w2.shape[0]
    h = x @ w1 + b1
    val, gate = h[..., :inner], h[..., inner:]
    act = val * (0.5 * gate * (1.0 + lax.erf(gate / math.sqrt(2.0))))
    return act @ w2 + b2


if __name__ == "__main__":
    # Shapes implied by the module: dim=32, mult=4 -> inner_dim=128, dim_out=32
    B, S, dim = 2, 8, 32
    mult = 4
    inner_dim = dim * mult
    dim_out = dim

    key = jax.random.PRNGKey(0)
    k_x, k_w1, k_b1, k_w2, k_b2 = jax.random.split(key, 5)

    x = jax.random.normal(k_x, (B, S, dim), dtype=jnp.float32)
    # Parameters stored pre-transposed (in, out) relative to torch's (out, in).
    w1 = jax.random.normal(k_w1, (dim, 2 * inner_dim), dtype=jnp.float32) * 0.05
    b1 = jax.random.normal(k_b1, (2 * inner_dim,), dtype=jnp.float32) * 0.05
    w2 = jax.random.normal(k_w2, (inner_dim, dim_out), dtype=jnp.float32) * 0.05
    b2 = jax.random.normal(k_b2, (dim_out,), dtype=jnp.float32) * 0.05

    params = prepare_feedforward_params(w1, b1, w2, b2)
    ref = _reference(x, w1, b1, w2, b2)

    # Fast path: weights resident in VMEM, single fused pass.
    out = feedforward_geglu(x, params)
    jax.block_until_ready(out)
    assert out.shape == (B, S, dim_out)
    err = float(jnp.max(jnp.abs(out - ref)))
    # bf16 matmul operands with f32 accumulation -> bf16-level tolerance.
    assert err < 5e-2, f"resident path mismatch vs reference, max abs err {err}"

    # Tiled fallback path, forced with small tiles on a slightly larger problem
    # so accumulator init/accumulate/finalize, bias slicing and multiple M tiles
    # are all exercised.
    B2, S2, dim2 = 2, 96, 64
    inner2, dout2 = 4 * dim2, dim2
    k2 = jax.random.split(jax.random.PRNGKey(1), 5)
    x2 = jax.random.normal(k2[0], (B2, S2, dim2), dtype=jnp.float32)
    w1_2 = jax.random.normal(k2[1], (dim2, 2 * inner2), dtype=jnp.float32) * 0.05
    b1_2 = jax.random.normal(k2[2], (2 * inner2,), dtype=jnp.float32) * 0.05
    w2_2 = jax.random.normal(k2[3], (inner2, dout2), dtype=jnp.float32) * 0.05
    b2_2 = jax.random.normal(k2[4], (dout2,), dtype=jnp.float32) * 0.05

    params2 = prepare_feedforward_params(w1_2, b1_2, w2_2, b2_2)
    out_t = feedforward_geglu(x2, params2, tm=64, tn=128, force_tiled=True)
    jax.block_until_ready(out_t)
    ref2 = _reference(x2, w1_2, b1_2, w2_2, b2_2)
    assert out_t.shape == (B2, S2, dout2)
    err_t = float(jnp.max(jnp.abs(out_t - ref2)))
    assert err_t < 5e-2, f"tiled path mismatch vs reference, max abs err {err_t}"

    print("KERNEL_OK")
</pallas_src>

<mosaic_0001>
module attributes {stable_mosaic.version = 11 : i64} {
  func.func @_ff_geglu_resident_kernel(%arg0: i32, %arg1: memref<16x128xbf16, #tpu.memory_space<vmem>>, %arg2: memref<128x256xbf16, #tpu.memory_space<vmem>>, %arg3: memref<1x256xf32, #tpu.memory_space<vmem>>, %arg4: memref<128x128xbf16, #tpu.memory_space<vmem>>, %arg5: memref<1x128xf32, #tpu.memory_space<vmem>>, %arg6: memref<16x128xf32, #tpu.memory_space<vmem>>) attributes {dimension_semantics = [#tpu.dimension_semantics<parallel>], iteration_bounds = array<i64: 1>, scalar_prefetch = 0 : i64, scratch_operands = 0 : i64, tpu.core_type = #tpu.core_type<tc>, window_params = [{transform_indices = @transform_0, window_bounds = array<i64: 16, 128>}, {pipeline_mode = #tpu.pipeline_mode<synchronous>, transform_indices = @transform_1, window_bounds = array<i64: 128, 256>}, {pipeline_mode = #tpu.pipeline_mode<synchronous>, transform_indices = @transform_2, window_bounds = array<i64: 1, 256>}, {pipeline_mode = #tpu.pipeline_mode<synchronous>, transform_indices = @transform_3, window_bounds = array<i64: 128, 128>}, {pipeline_mode = #tpu.pipeline_mode<synchronous>, transform_indices = @transform_4, window_bounds = array<i64: 1, 128>}, {transform_indices = @transform_5, window_bounds = array<i64: 16, 128>}]} {
    %c0 = arith.constant 0 : index
    %c0_0 = arith.constant 0 : index
    %0 = vector.load %arg1[%c0, %c0_0] : memref<16x128xbf16, #tpu.memory_space<vmem>>, vector<16x128xbf16>
    %c0_1 = arith.constant 0 : index
    %c0_2 = arith.constant 0 : index
    %1 = vector.load %arg2[%c0_1, %c0_2] : memref<128x256xbf16, #tpu.memory_space<vmem>>, vector<128x256xbf16>
    %cst = arith.constant dense<0.000000e+00> : vector<16x256xf32>
    %2 = tpu.matmul %0, %1, %cst {dimension_numbers = #tpu.dot_dimension_numbers<[1], [0], [0], [1], [0, 0, 1, 1], [], []>} : vector<16x128xbf16>, vector<128x256xbf16>, vector<16x256xf32> -> vector<16x256xf32>
    %c0_3 = arith.constant 0 : index
    %c0_4 = arith.constant 0 : index
    %3 = vector.load %arg3[%c0_3, %c0_4] : memref<1x256xf32, #tpu.memory_space<vmem>>, vector<1x256xf32>
    %4 = vector.broadcast %3 : vector<1x256xf32> to vector<16x256xf32>
    %5 = arith.addf %2, %4 : vector<16x256xf32>
    %6 = vector.extract_strided_slice %5 {offsets = [0, 0], sizes = [16, 128], strides = [1, 1]} : vector<16x256xf32> to vector<16x128xf32>
    %7 = vector.extract_strided_slice %5 {offsets = [0, 128], sizes = [16, 128], strides = [1, 1]} : vector<16x256xf32> to vector<16x128xf32>
    %cst_5 = arith.constant 5.000000e-01 : f32
    %8 = vector.broadcast %cst_5 : f32 to vector<16x128xf32>
    %9 = arith.mulf %8, %7 : vector<16x128xf32>
    %cst_6 = arith.constant 0.707106769 : f32
    %10 = vector.broadcast %cst_6 : f32 to vector<16x128xf32>
    %11 = arith.mulf %7, %10 : vector<16x128xf32>
    %12 = math.erf %11 : vector<16x128xf32>
    %cst_7 = arith.constant 1.000000e+00 : f32
    %13 = vector.broadcast %cst_7 : f32 to vector<16x128xf32>
    %14 = arith.addf %13, %12 : vector<16x128xf32>
    %15 = arith.mulf %9, %14 : vector<16x128xf32>
    %16 = arith.mulf %6, %15 : vector<16x128xf32>
    %17 = arith.truncf %16 : vector<16x128xf32> to vector<16x128xbf16>
    %c0_8 = arith.constant 0 : index
    %c0_9 = arith.constant 0 : index
    %18 = vector.load %arg4[%c0_8, %c0_9] : memref<128x128xbf16, #tpu.memory_space<vmem>>, vector<128x128xbf16>
    %cst_10 = arith.constant dense<0.000000e+00> : vector<16x128xf32>
    %19 = tpu.matmul %17, %18, %cst_10 {dimension_numbers = #tpu.dot_dimension_numbers<[1], [0], [0], [1], [0, 0, 1, 1], [], []>} : vector<16x128xbf16>, vector<128x128xbf16>, vector<16x128xf32> -> vector<16x128xf32>
    %c0_11 = arith.constant 0 : index
    %c0_12 = arith.constant 0 : index
    %20 = vector.load %arg5[%c0_11, %c0_12] : memref<1x128xf32, #tpu.memory_space<vmem>>, vector<1x128xf32>
    %21 = vector.broadcast %20 : vector<1x128xf32> to vector<16x128xf32>
    %22 = arith.addf %19, %21 : vector<16x128xf32>
    %c0_13 = arith.constant 0 : index
    %c0_14 = arith.constant 0 : index
    %23 = vector.load %arg6[%c0_13, %c0_14] : memref<16x128xf32, #tpu.memory_space<vmem>>, vector<16x128xf32>
    tpu.vector_store %arg6[%c0_13, %c0_14], %22 {strides = array<i32>} : memref<16x128xf32, #tpu.memory_space<vmem>>, vector<16x128xf32>,
    return
  }
  func.func @transform_0(%arg0: i32) -> (i32, i32) {
    %c0_i32 = arith.constant 0 : i32
    %c0_i32_0 = arith.constant 0 : i32
    return %arg0, %c0_i32 : i32, i32
  }
  func.func @transform_1(%arg0: i32) -> (i32, i32) {
    %c0_i32 = arith.constant 0 : i32
    %c0_i32_0 = arith.constant 0 : i32
    %c0_i32_1 = arith.constant 0 : i32
    return %c0_i32, %c0_i32_0 : i32, i32
  }
  func.func @transform_2(%arg0: i32) -> (i32, i32) {
    %c0_i32 = arith.constant 0 : i32
    %c0_i32_0 = arith.constant 0 : i32
    %c0_i32_1 = arith.constant 0 : i32
    return %c0_i32, %c0_i32_0 : i32, i32
  }
  func.func @transform_3(%arg0: i32) -> (i32, i32) {
    %c0_i32 = arith.constant 0 : i32
    %c0_i32_0 = arith.constant 0 : i32
    %c0_i32_1 = arith.constant 0 : i32
    return %c0_i32, %c0_i32_0 : i32, i32
  }
  func.func @transform_4(%arg0: i32) -> (i32, i32) {
    %c0_i32 = arith.constant 0 : i32
    %c0_i32_0 = arith.constant 0 : i32
    %c0_i32_1 = arith.constant 0 : i32
    return %c0_i32, %c0_i32_0 : i32, i32
  }
  func.func @transform_5(%arg0: i32) -> (i32, i32) {
    %c0_i32 = arith.constant 0 : i32
    %c0_i32_0 = arith.constant 0 : i32
    return %arg0, %c0_i32 : i32, i32
  }
}

</mosaic_0001>

<llo_original>
// kernel: tpu_custom_call.1
$region0: #{tpu_custom_call.1}
  #allocation0 [shape = 'u32[]', space=smem, size = 0x4, offset = 0x4, fixed_abs, tag = 'smem constant byte address 0x4 - core index']
  #allocation1 [shape = 'u32[144,128]{1,0:T(1,128)}', space=vmem, size = 0x12000, scoped, tag = 'internal scratch']
  %s0 = inlined_call_operand.hbm [shape: bf16[16,128], index: 0, kind: input, shape index: {}]
  %s1 = inlined_call_operand.hbm [shape: bf16[128,256], index: 1, kind: input, shape index: {}]
  %s2 = inlined_call_operand.vmem [shape: f32[1,256], index: 2, kind: input, shape index: {}]
  %s3 = inlined_call_operand.hbm [shape: bf16[128,128], index: 3, kind: input, shape index: {}]
  %s4 = inlined_call_operand.vmem [shape: f32[1,128], index: 4, kind: input, shape index: {}]
  %s5 = inlined_call_operand.hbm [shape: f32[16,128], index: 5, kind: output, shape index: {}]
  %s6 = sld [smem:[#allocation0]]
  $region42: #{tpu_custom_call.1} parent=0
    _
  %s8 = ssub.s32 1, %s6
  %s9 = scalar_select 0, %s8, %s6
  $region1: #{tpu_custom_call.1} parent=0
    #allocation2 [shape = 'u8[4096]{0}', space=vmem, size = 0x1000, scoped, tag = 'input window, operand 0, single buffered']
    #allocation3 [shape = 's32[1]{0}', space=sflag, size = 0x4, scoped, tag = 'scoped memory for tpu_custom_call.1']
    #allocation4 [shape = 's32[1]{0}', space=sflag, size = 0x4, scoped, tag = 'scoped memory for tpu_custom_call.1']
    #allocation5 [shape = 'u8[65536]{0}', space=vmem, size = 0x10000, scoped, tag = 'input window, operand 1, single buffered']
    #allocation6 [shape = 's32[1]{0}', space=sflag, size = 0x4, scoped, tag = 'scoped memory for tpu_custom_call.1']
    #allocation7 [shape = 'u8[32768]{0}', space=vmem, size = 0x8000, scoped, tag = 'input window, operand 3, single buffered']
    #allocation8 [shape = 'u8[8192]{0}', space=vmem, size = 0x2000, scoped, tag = 'output window, operand 0, single buffered']
    %10 = vsyncpa [#allocation3], 0
    %11 = vsyncpa [#allocation6], 0
    %12 = vsyncpa [#allocation4], 0
    // Predicated region
    $region2: #{tpu_custom_call.1} parent=1 // pred_check
      _
    $region3: #{tpu_custom_call.1} parent=1 // pred_check_branch
      %14 = sbr.rel (0) target = $region5
    $region4: #{tpu_custom_call.1} parent=1 // pred_region
      %s16 = ssub.s32 128, 128
      %17 = vsyncadd [#allocation3], %s16
      %s18 = sshll.u32 [#allocation2], 4
      %s19 = int_to_ptr.vmem [resolvable:$true] %s18
      %24 = dma.hbm_to_vmem [thread:$0]  %s0, 128, %s19, [#allocation3], 64, 64, 4
    $region5: #{tpu_custom_call.1} parent=1 // pred_fallthru
      _
    // Predicated region
    $region6: #{tpu_custom_call.1} parent=1 // pred_check
      _
    $region7: #{tpu_custom_call.1} parent=1 // pred_check_branch
      %26 = sbr.rel (0) target = $region9
    $region8: #{tpu_custom_call.1} parent=1 // pred_region
      %s28 = ssub.s32 2048, 2048
      %29 = vsyncadd [#allocation6], %s28
      %s30 = sshll.u32 [#allocation5], 4
      %s31 = int_to_ptr.vmem [resolvable:$true] %s30
      %36 = dma.hbm_to_vmem [thread:$0]  %s1, 2048, %s31, [#allocation6], 128, 128, 8
    $region9: #{tpu_custom_call.1} parent=1 // pred_fallthru
      _
    // Predicated region
    $region10: #{tpu_custom_call.1} parent=1 // pred_check
      _
    $region11: #{tpu_custom_call.1} parent=1 // pred_check_branch
      %38 = sbr.rel (0) target = $region13
    $region12: #{tpu_custom_call.1} parent=1 // pred_region
      _
    $region13: #{tpu_custom_call.1} parent=1 // pred_fallthru
      _
    // Predicated region
    $region14: #{tpu_custom_call.1} parent=1 // pred_check
      _
    $region15: #{tpu_custom_call.1} parent=1 // pred_check_branch
      %40 = sbr.rel (0) target = $region17
    $region16: #{tpu_custom_call.1} parent=1 // pred_region
      %s42 = ssub.s32 1024, 1024
      %43 = vsyncadd [#allocation6], %s42
      %s44 = sshll.u32 [#allocation7], 4
      %s45 = int_to_ptr.vmem [resolvable:$true] %s44
      %50 = dma.hbm_to_vmem [thread:$0]  %s3, 1024, %s45, [#allocation6], 64, 64, 4
    $region17: #{tpu_custom_call.1} parent=1 // pred_fallthru
      _
    // Predicated region
    $region18: #{tpu_custom_call.1} parent=1 // pred_check
      _
    $region19: #{tpu_custom_call.1} parent=1 // pred_check_branch
      %52 = sbr.rel (0) target = $region21
    $region20: #{tpu_custom_call.1} parent=1 // pred_region
      _
    $region21: #{tpu_custom_call.1} parent=1 // pred_fallthru
      _
    // Predicated region
    $region22: #{tpu_custom_call.1} parent=1 // pred_check
      _
    $region23: #{tpu_custom_call.1} parent=1 // pred_check_branch
      %54 = sbr.rel (0) target = $region25
    $region24: #{tpu_custom_call.1} parent=1 // pred_region
      %55 = dma.done [#allocation3], 128
    $region25: #{tpu_custom_call.1} parent=1 // pred_fallthru
      _
    // Predicated region
    $region26: #{tpu_custom_call.1} parent=1 // pred_check
      _
    $region27: #{tpu_custom_call.1} parent=1 // pred_check_branch
      %57 = sbr.rel (0) target = $region29
    $region28: #{tpu_custom_call.1} parent=1 // pred_region
      %58 = dma.done [#allocation6], 2048
    $region29: #{tpu_custom_call.1} parent=1 // pred_fallthru
      _
    // Predicated region
    $region30: #{tpu_custom_call.1} parent=1 // pred_check
      _
    $region31: #{tpu_custom_call.1} parent=1 // pred_check_branch
      %60 = sbr.rel (0) target = $region33
    $region32: #{tpu_custom_call.1} parent=1 // pred_region
      %61 = dma.done [#allocation6], 1024
    $region33: #{tpu_custom_call.1} parent=1 // pred_fallthru
      _
    %v63 = vld [vmem:[#allocation2] sm:$0xf]
    %v64 = vld [vmem:[#allocation2 + $0x4] sm:$0xf]
    %v65 = vld [vmem:[#allocation5] sm:$0xff]
    %v66 = vld [vmem:[#allocation5 + $0x8] sm:$0xff]
    %v67 = vld [vmem:[#allocation5 + $0x10] sm:$0xff]
    %v68 = vld [vmem:[#allocation5 + $0x18] sm:$0xff]
    %v69 = vld [vmem:[#allocation5 + $0x20] sm:$0xff]
    %v70 = vld [vmem:[#allocation5 + $0x28] sm:$0xff]
    %v71 = vld [vmem:[#allocation5 + $0x30] sm:$0xff]
    %v72 = vld [vmem:[#allocation5 + $0x38] sm:$0xff]
    %v73 = vld [vmem:[#allocation5 + $0x40] sm:$0xff]
    %v74 = vld [vmem:[#allocation5 + $0x48] sm:$0xff]
    %v75 = vld [vmem:[#allocation5 + $0x50] sm:$0xff]
    %v76 = vld [vmem:[#allocation5 + $0x58] sm:$0xff]
    %v77 = vld [vmem:[#allocation5 + $0x60] sm:$0xff]
    %v78 = vld [vmem:[#allocation5 + $0x68] sm:$0xff]
    %v79 = vld [vmem:[#allocation5 + $0x70] sm:$0xff]
    %v80 = vld [vmem:[#allocation5 + $0x78] sm:$0xff]
    %v81 = vld [vmem:[%s2] sm:$0x3]
    %v83 = vlaneseq
    %v84 = vshrl.u32 %v83, 7
    %v85 = vsub.s32 0, %v84
    %v86 = vrot.slane %v81, %v85
    %v87 = vlaneseq
    %v88 = vshrl.u32 %v87, 7
    %v89 = vsub.s32 1, %v88
    %v90 = vrot.slane %v81, %v89
    %v95 = vunpack.c.l.b16 %v63
    %v96 = vunpack.c.l.b16 %v64
    %v97 = vpack.c.b16 %v96, %v95
    %v115 = vunpack.c.l.b16 %v65
    %v116 = vunpack.c.h.b16 %v65
    %v117 = vunpack.c.l.b16 %v66
    %v118 = vunpack.c.h.b16 %v66
    %v119 = vunpack.c.l.b16 %v67
    %v120 = vunpack.c.h.b16 %v67
    %v121 = vunpack.c.l.b16 %v68
    %v122 = vunpack.c.h.b16 %v68
    %v123 = vunpack.c.l.b16 %v69
    %v124 = vunpack.c.h.b16 %v69
    %v125 = vunpack.c.l.b16 %v70
    %v126 = vunpack.c.h.b16 %v70
    %v127 = vunpack.c.l.b16 %v71
    %v128 = vunpack.c.h.b16 %v71
    %v129 = vunpack.c.l.b16 %v72
    %v130 = vunpack.c.h.b16 %v72
    %v131 = vunpack.c.l.b16 %v73
    %v132 = vunpack.c.h.b16 %v73
    %v133 = vunpack.c.l.b16 %v74
    %v134 = vunpack.c.h.b16 %v74
    %v135 = vunpack.c.l.b16 %v75
    %v136 = vunpack.c.h.b16 %v75
    %v137 = vunpack.c.l.b16 %v76
    %v138 = vunpack.c.h.b16 %v76
    %v139 = vunpack.c.l.b16 %v77
    %v140 = vunpack.c.h.b16 %v77
    %v141 = vunpack.c.l.b16 %v78
    %v142 = vunpack.c.h.b16 %v78
    %v143 = vunpack.c.l.b16 %v79
    %v144 = vunpack.c.h.b16 %v79
    %v145 = vunpack.c.l.b16 %v80
    %v146 = vunpack.c.h.b16 %v80
    %v147 = vpack.c.b16 %v117, %v115
    %v148 = vpack.c.b16 %v118, %v116
    %v149 = vpack.c.b16 %v121, %v119
    %v150 = vpack.c.b16 %v122, %v120
    %v151 = vpack.c.b16 %v125, %v123
    %v152 = vpack.c.b16 %v126, %v124
    %v153 = vpack.c.b16 %v129, %v127
    %v154 = vpack.c.b16 %v130, %v128
    %v155 = vpack.c.b16 %v133, %v131
    %v156 = vpack.c.b16 %v134, %v132
    %v157 = vpack.c.b16 %v137, %v135
    %v158 = vpack.c.b16 %v138, %v136
    %v159 = vpack.c.b16 %v141, %v139
    %v160 = vpack.c.b16 %v142, %v140
    %v161 = vpack.c.b16 %v145, %v143
    %v162 = vpack.c.b16 %v146, %v144
    %179 = vmatprep.subr.bf16.mxu0 %v162
    %180 = vmatpush1.bf16.msra.mxu0 %v161
    %181 = vmatprep.subr.bf16.mxu0 %v160
    %182 = vmatpush1.bf16.msra.mxu0 %v159
    %183 = vmatprep.subr.bf16.mxu0 %v158
    %184 = vmatpush1.bf16.msra.mxu0 %v157
    %185 = vmatprep.subr.bf16.mxu0 %v156
    %186 = vmatpush1.bf16.msra.mxu0 %v155
    %187 = vmatprep.subr.bf16.mxu0 %v154
    %188 = vmatpush1.bf16.msra.mxu0 %v153
    %189 = vmatprep.subr.bf16.mxu0 %v152
    %190 = vmatpush1.bf16.msra.mxu0 %v151
    %191 = vmatprep.subr.bf16.mxu0 %v150
    %192 = vmatpush1.bf16.msra.mxu0 %v149
    %193 = vmatprep.subr.bf16.mxu0 %v148
    %194 = vmatpush1.bf16.msra.mxu0 %v147
    %195 = vmatprep.subr.bf16.mxu0 0
    %196 = vmatpush2.bf16.msra.mxu0 0
    %197 = vmatprep.subr.bf16.mxu0 0
    %198 = vmatpush2.bf16.msra.mxu0 0
    %199 = vmatprep.subr.bf16.mxu0 0
    %200 = vmatpush2.bf16.msra.mxu0 0
    %201 = vmatprep.subr.bf16.mxu0 0
    %202 = vmatpush2.bf16.msra.mxu0 0
    %203 = vmatprep.subr.bf16.mxu0 0
    %204 = vmatpush2.bf16.msra.mxu0 0
    %205 = vmatprep.subr.bf16.mxu0 0
    %206 = vmatpush2.bf16.msra.mxu0 0
    %207 = vmatprep.subr.bf16.mxu0 0
    %208 = vmatpush2.bf16.msra.mxu0 0
    %209 = vmatprep.subr.bf16.mxu0 0
    %210 = vmatpush2.bf16.msra.mxu0 0
    %211 = vmatprep.mubr.bf16.mxu0 0
    %212 = vmatmul.mubr.bf16.gmra.mxu0 %v97
    %v213 = vpop.f32.mrf.mxu0
    %v214 = vadd.f32 %v86, %v213
    %v215 = vpop.f32.mrf.mxu0
    %v216 = vadd.f32 %v90, %v215
    %v217 = vpop.f32.mrf.mxu0
    %v218 = vadd.f32 %v86, %v217
    %v219 = vpop.f32.mrf.mxu0
    %v220 = vadd.f32 %v90, %v219
    %221 = vdwg.mxu0
    %v222 = vmul.f32 %v216, 0.5
    %v223 = vmul.f32 %v220, 0.5
    %v224 = vmul.f32 %v216, 0.70710677
    %v225 = vmul.f32 %v220, 0.70710677
    %v226 = verf.f32.pop %v224
    %v227 = verf.f32.pop %v225
    %v228 = vadd.f32 %v226, 1.0
    %v229 = vadd.f32 %v227, 1.0
    %v230 = vmul.f32 %v222, %v228
    %v231 = vmul.f32 %v223, %v229
    %v232 = vmul.f32 %v214, %v230
    %v233 = vmul.f32 %v218, %v231
    %v234 = vpack.c.bf16 %v233, %v232
    %v235 = vld [vmem:[#allocation7] sm:$0xf]
    %v236 = vld [vmem:[#allocation7 + $0x4] sm:$0xf]
    %v237 = vld [vmem:[#allocation7 + $0x8] sm:$0xf]
    %v238 = vld [vmem:[#allocation7 + $0xc] sm:$0xf]
    %v239 = vld [vmem:[#allocation7 + $0x10] sm:$0xf]
    %v240 = vld [vmem:[#allocation7 + $0x14] sm:$0xf]
    %v241 = vld [vmem:[#allocation7 + $0x18] sm:$0xf]
    %v242 = vld [vmem:[#allocation7 + $0x1c] sm:$0xf]
    %v243 = vld [vmem:[#allocation7 + $0x20] sm:$0xf]
    %v244 = vld [vmem:[#allocation7 + $0x24] sm:$0xf]
    %v245 = vld [vmem:[#allocation7 + $0x28] sm:$0xf]
    %v246 = vld [vmem:[#allocation7 + $0x2c] sm:$0xf]
    %v247 = vld [vmem:[#allocation7 + $0x30] sm:$0xf]
    %v248 = vld [vmem:[#allocation7 + $0x34] sm:$0xf]
    %v249 = vld [vmem:[#allocation7 + $0x38] sm:$0xf]
    %v250 = vld [vmem:[#allocation7 + $0x3c] sm:$0xf]
    %v251 = vld [vmem:[%s4] sm:$0x1]
    %v253 = vlaneseq
    %v254 = vshrl.u32 %v253, 7
    %v255 = vsub.s32 0, %v254
    %v256 = vrot.slane %v251, %v255
    %v274 = vunpack.c.l.b16 %v235
    %v275 = vunpack.c.l.b16 %v236
    %v276 = vunpack.c.l.b16 %v237
    %v277 = vunpack.c.l.b16 %v238
    %v278 = vunpack.c.l.b16 %v239
    %v279 = vunpack.c.l.b16 %v240
    %v280 = vunpack.c.l.b16 %v241
    %v281 = vunpack.c.l.b16 %v242
    %v282 = vunpack.c.l.b16 %v243
    %v283 = vunpack.c.l.b16 %v244
    %v284 = vunpack.c.l.b16 %v245
    %v285 = vunpack.c.l.b16 %v246
    %v286 = vunpack.c.l.b16 %v247
    %v287 = vunpack.c.l.b16 %v248
    %v288 = vunpack.c.l.b16 %v249
    %v289 = vunpack.c.l.b16 %v250
    %v290 = vpack.c.b16 %v275, %v274
    %v291 = vpack.c.b16 %v277, %v276
    %v292 = vpack.c.b16 %v279, %v278
    %v293 = vpack.c.b16 %v281, %v280
    %v294 = vpack.c.b16 %v283, %v282
    %v295 = vpack.c.b16 %v285, %v284
    %v296 = vpack.c.b16 %v287, %v286
    %v297 = vpack.c.b16 %v289, %v288
    %306 = vmatprep.subr.bf16.mxu0 0
    %307 = vmatpush1.bf16.msra.mxu0 %v297
    %308 = vmatprep.subr.bf16.mxu0 0
    %309 = vmatpush1.bf16.msra.mxu0 %v296
    %310 = vmatprep.subr.bf16.mxu0 0
    %311 = vmatpush1.bf16.msra.mxu0 %v295
    %312 = vmatprep.subr.bf16.mxu0 0
    %313 = vmatpush1.bf16.msra.mxu0 %v294
    %314 = vmatprep.subr.bf16.mxu0 0
    %315 = vmatpush1.bf16.msra.mxu0 %v293
    %316 = vmatprep.subr.bf16.mxu0 0
    %317 = vmatpush1.bf16.msra.mxu0 %v292
    %318 = vmatprep.subr.bf16.mxu0 0
    %319 = vmatpush1.bf16.msra.mxu0 %v291
    %320 = vmatprep.subr.bf16.mxu0 0
    %321 = vmatpush1.bf16.msra.mxu0 %v290
    %322 = vmatprep.subr.bf16.mxu0 0
    %323 = vmatpush2.bf16.msra.mxu0 0
    %324 = vmatprep.subr.bf16.mxu0 0
    %325 = vmatpush2.bf16.msra.mxu0 0
    %326 = vmatprep.subr.bf16.mxu0 0
    %327 = vmatpush2.bf16.msra.mxu0 0
    %328 = vmatprep.subr.bf16.mxu0 0
    %329 = vmatpush2.bf16.msra.mxu0 0
    %330 = vmatprep.subr.bf16.mxu0 0
    %331 = vmatpush2.bf16.msra.mxu0 0
    %332 = vmatprep.subr.bf16.mxu0 0
    %333 = vmatpush2.bf16.msra.mxu0 0
    %334 = vmatprep.subr.bf16.mxu0 0
    %335 = vmatpush2.bf16.msra.mxu0 0
    %336 = vmatprep.subr.bf16.mxu0 0
    %337 = vmatpush2.bf16.msra.mxu0 0
    %338 = vmatprep.mubr.bf16.mxu0 0
    %339 = vmatmul.mubr.bf16.gmra.mxu0 %v234
    %v340 = vpop.f32.mrf.mxu0
    %v341 = vadd.f32 %v256, %v340
    %v342 = vpop.f32.mrf.mxu0
    %v343 = vpop.f32.mrf.mxu0
    %v344 = vadd.f32 %v256, %v343
    %v345 = vpop.f32.mrf.mxu0
    %346 = vdwg.mxu0
    %347 = vst [vmem:[#allocation8] sm:$0xff] %v341
    %348 = vst [vmem:[#allocation8 + $0x8] sm:$0xff] %v344
    // Predicated region
    $region34: #{tpu_custom_call.1} parent=1 // pred_check
      _
    $region35: #{tpu_custom_call.1} parent=1 // pred_check_branch
      %350 = sbr.rel (0) target = $region37
    $region36: #{tpu_custom_call.1} parent=1 // pred_region
      %s352 = ssub.s32 256, 256
      %353 = vsyncadd [#allocation4], %s352
      %s354 = sshll.u32 [#allocation8], 4
      %s355 = int_to_ptr.vmem [resolvable:$true] %s354
      %360 = dma.vmem_to_hbm [thread:$0]  %s355, 256, %s5, [#allocation4], 128, 128, 8
    $region37: #{tpu_custom_call.1} parent=1 // pred_fallthru
      _
    // Predicated region
    $region38: #{tpu_custom_call.1} parent=1 // pred_check
      _
    $region39: #{tpu_custom_call.1} parent=1 // pred_check_branch
      %362 = sbr.rel (0) target = $region41
    $region40: #{tpu_custom_call.1} parent=1 // pred_region
      %363 = dma.done [#allocation4], 256
    $region41: #{tpu_custom_call.1} parent=1 // pred_fallthru
      _
    %364 = vsyncpa [#allocation3], 1
    %365 = vsyncpa [#allocation6], 1
    %366 = vsyncpa [#allocation4], 1

</llo_original>
